<compile_context>
chip_gen: v6e
topology: v6e:2x2x1
jax: 0.10.0
libtpu: 0.0.40
codegen_flags: <defaults>
</compile_context>

<pallas_src>
import jax
import jax.numpy as jnp
from jax.experimental import pallas as pl
from jax.experimental.pallas import tpu as pltpu

_LANE = 128      # lane (last-dim) granularity
_SUBLANE = 8     # sublane (second-to-last dim) granularity


def _round_up(n, m):
    return ((n + m - 1) // m) * m


def _vmem_capacity_bytes():
    """Per-TensorCore VMEM capacity; conservative fallback if query fails."""
    try:
        cap = int(pltpu.get_tpu_info().vmem_capacity_bytes)
        if cap > 0:
            return cap
    except Exception:
        pass
    return 64 << 20  # v7x per-TC size == safe lower bound across generations


def _make_mlp_kernel(num_linear):
    """Fused MLP body: x_ref, (w0, b0, ..., w_{L-1}, b_{L-1}), out_ref."""

    def kernel(*refs):
        x_ref = refs[0]
        out_ref = refs[-1]
        wb = refs[1:-1]
        h = x_ref[...]
        for li in range(num_linear):
            w = wb[2 * li][...]
            b = wb[2 * li + 1][...].astype(jnp.float32)
            # Feed the MXU in the weight dtype (bf16 stack -> bf16 MXU),
            # accumulate in f32; bias-add / ReLU stay f32 on the VPU.
            h = jnp.dot(h.astype(w.dtype), w,
                        preferred_element_type=jnp.float32) + b
            if li != num_linear - 1:
                h = jnp.maximum(h, 0.0)
        out_ref[...] = h.astype(out_ref.dtype)

    return kernel


def nn_classifier_forward(x, weights, biases, *, batch_tile=512):
    """Run the fused, batch-tiled MLP Pallas kernel.

    x:       (B, dim_features)
    weights: list of (in_dim, out_dim) arrays (f32 or bf16)
    biases:  list of (1, out_dim) or (out_dim,) arrays
    returns: (B, num_classes) float32
    """
    num_linear = len(weights)
    B, F = x.shape
    num_classes = weights[-1].shape[1]
    w_dtype = jnp.dtype(weights[0].dtype)
    out_dtype = w_dtype  # lane-padded output slab in param dtype, upcast later

    # Pad only the *output* dims of each layer to lane multiples.
    dims = [F] + [w.shape[1] for w in weights]
    dims_p = [F] + [_round_up(d, _LANE) for d in dims[1:]]
    out_pad = dims_p[-1]

    # ---- batch tile selection against the per-TC VMEM budget -------------
    vmem_cap = int(0.85 * _vmem_capacity_bytes())
    param_bytes = 0
    for li in range(num_linear):
        di, do = dims_p[li], dims_p[li + 1]
        param_bytes += di * do * w_dtype.itemsize  # weight
        param_bytes += do * 4                       # f32 bias

    def footprint(tb_, w_bufs):
        io = 2 * tb_ * (F * jnp.dtype(x.dtype).itemsize
                        + out_pad * out_dtype.itemsize)   # double-buffered x/out
        act = 4 * tb_ * max(dims_p) * 4                   # f32 working activations
        return w_bufs * param_bytes + io + act + (2 << 20)

    B_p = _round_up(B, _SUBLANE)
    tb = _round_up(min(batch_tile, B_p), _SUBLANE)
    while footprint(tb, 1) > vmem_cap and tb > 2 * _SUBLANE:
        tb = _round_up(tb // 2, _SUBLANE)
    # v7x megacore: ("parallel",) only shards the batch grid over 2 TCs if
    # there are >= 2 grid steps; halve the tile if it would be a single step.
    if _round_up(B_p, tb) // tb < 2 and tb >= 2 * _LANE:
        tb = _round_up(tb // 2, _SUBLANE)
    B_p = _round_up(B_p, tb)
    grid = (B_p // tb,)

    # ---- pad inputs / params ---------------------------------------------
    x_p = x if B_p == B else jnp.pad(x, ((0, B_p - B), (0, 0)))
    w_p, b_p = [], []
    for li, (w, b) in enumerate(zip(weights, biases)):
        di, do = dims_p[li], dims_p[li + 1]
        w = w.astype(w_dtype)
        pad_r, pad_c = di - w.shape[0], do - w.shape[1]
        w_p.append(jnp.pad(w, ((0, pad_r), (0, pad_c))) if (pad_r or pad_c) else w)
        b2 = jnp.asarray(b).reshape(1, -1).astype(jnp.float32)
        b_p.append(jnp.pad(b2, ((0, 0), (0, do - b2.shape[1])))
                   if do != b2.shape[1] else b2)

    kernel = _make_mlp_kernel(num_linear)
    out_shape = jax.ShapeDtypeStruct((B_p, out_pad), out_dtype)
    out_spec = pl.BlockSpec((tb, out_pad), lambda i: (i, 0),
                            memory_space=pltpu.MemorySpace.VMEM)

    def run(single_buffer_weights):
        w_kwargs = ({"pipeline_mode": pl.Buffered(1)}
                    if single_buffer_weights else {})
        in_arrays = [x_p]
        in_specs = [pl.BlockSpec((tb, F), lambda i: (i, 0),
                                 memory_space=pltpu.MemorySpace.VMEM)]
        for li in range(num_linear):
            in_arrays += [w_p[li], b_p[li]]
            in_specs.append(pl.BlockSpec(w_p[li].shape, lambda i: (0, 0),
                                         memory_space=pltpu.MemorySpace.VMEM,
                                         **w_kwargs))
            in_specs.append(pl.BlockSpec(b_p[li].shape, lambda i: (0, 0),
                                         memory_space=pltpu.MemorySpace.VMEM,
                                         **w_kwargs))
        w_bufs = 1 if single_buffer_weights else 2
        vmem_bytes = int(min(max(footprint(tb, w_bufs), 16 << 20), vmem_cap))
        return pl.pallas_call(
            kernel,
            out_shape=out_shape,
            grid=grid,
            in_specs=in_specs,
            out_specs=out_spec,
            compiler_params=pltpu.CompilerParams(
                dimension_semantics=("parallel",),  # v7x: shard batch over 2 TCs
                vmem_limit_bytes=vmem_bytes,
            ),
        )(*in_arrays)

    try:
        out = run(single_buffer_weights=True)
    except Exception:
        # pipeline_mode=pl.Buffered(1) not supported by this jax version:
        # fall back to default (double) buffering of the constant weights.
        out = run(single_buffer_weights=False)

    # Strip batch / class padding outside the kernel; return f32.
    return out[:B, :num_classes].astype(jnp.float32)


def mlp_reference(x, weights, biases):
    """Pure-JAX reference with the same dtype/accumulation policy as the kernel."""
    w_dtype = jnp.dtype(weights[0].dtype)
    h = x
    for i, (w, b) in enumerate(zip(weights, biases)):
        b2 = jnp.asarray(b).reshape(1, -1).astype(jnp.float32)
        h = jnp.dot(h.astype(w_dtype), w.astype(w_dtype),
                    preferred_element_type=jnp.float32) + b2
        if i != len(weights) - 1:
            h = jnp.maximum(h, 0.0)
    return h.astype(w_dtype).astype(jnp.float32)


def init_params(key, dim_features, num_classes=10, dim_hidden=256, num_layers=1,
                dtype=jnp.float32):
    """PyTorch-Linear-style init (uniform(-1/sqrt(fan_in), +1/sqrt(fan_in)))."""
    dims = [dim_features, dim_hidden] + [dim_hidden] * num_layers + [num_classes]
    weights, biases = [], []
    for i in range(len(dims) - 1):
        fan_in, fan_out = dims[i], dims[i + 1]
        key, kw, kb = jax.random.split(key, 3)
        bound = 1.0 / (fan_in ** 0.5)
        w = jax.random.uniform(kw, (fan_in, fan_out), jnp.float32, -bound, bound)
        b = jax.random.uniform(kb, (1, fan_out), jnp.float32, -bound, bound)
        weights.append(w.astype(dtype))
        biases.append(b.astype(jnp.float32))
    return weights, biases


if __name__ == "__main__":
    # Small shapes consistent with the module: batch=8, dim_features=32,
    # dim_hidden=32, num_classes=10, num_layers=1.  At these toy sizes the
    # call is fixed-overhead-bound; padding/tiling pays off at real widths.
    B, DIM_FEATURES, NUM_CLASSES, DIM_HIDDEN, NUM_LAYERS = 8, 32, 10, 32, 1

    key = jax.random.PRNGKey(0)
    key, kx = jax.random.split(key)
    x = jax.random.normal(kx, (B, DIM_FEATURES), jnp.float32)

    weights, biases = init_params(
        key, DIM_FEATURES, num_classes=NUM_CLASSES,
        dim_hidden=DIM_HIDDEN, num_layers=NUM_LAYERS, dtype=jnp.float32,
    )

    # 1) f32 param stack: strict check against the pure-JAX reference.
    out = jax.block_until_ready(nn_classifier_forward(x, weights, biases))
    ref = jax.block_until_ready(mlp_reference(x, weights, biases))
    assert out.shape == (B, NUM_CLASSES), out.shape
    assert jnp.allclose(out, ref, atol=1e-4, rtol=1e-4), "f32 mismatch vs reference"

    # 2) bf16 weight stack (the fast MXU path on v5e/v6e/v7x): loose check.
    w_bf16 = [w.astype(jnp.bfloat16) for w in weights]
    out_bf = jax.block_until_ready(nn_classifier_forward(x, w_bf16, biases))
    ref_bf = jax.block_until_ready(mlp_reference(x, w_bf16, biases))
    assert out_bf.shape == (B, NUM_CLASSES), out_bf.shape
    assert jnp.allclose(out_bf, ref_bf, atol=3e-2, rtol=3e-2), "bf16 mismatch vs reference"

    print("KERNEL_OK")
</pallas_src>

<mosaic_0001>
module attributes {stable_mosaic.version = 11 : i64} {
  func.func @kernel(%arg0: i32, %arg1: memref<8x32xf32, #tpu.memory_space<vmem>>, %arg2: memref<32x128xf32, #tpu.memory_space<vmem>>, %arg3: memref<1x128xf32, #tpu.memory_space<vmem>>, %arg4: memref<128x128xf32, #tpu.memory_space<vmem>>, %arg5: memref<1x128xf32, #tpu.memory_space<vmem>>, %arg6: memref<128x128xf32, #tpu.memory_space<vmem>>, %arg7: memref<1x128xf32, #tpu.memory_space<vmem>>, %arg8: memref<8x128xf32, #tpu.memory_space<vmem>>) attributes {dimension_semantics = [#tpu.dimension_semantics<parallel>], iteration_bounds = array<i64: 1>, scalar_prefetch = 0 : i64, scratch_operands = 0 : i64, tpu.core_type = #tpu.core_type<tc>, window_params = [{transform_indices = @transform_0, window_bounds = array<i64: 8, 32>}, {pipeline_mode = #tpu.pipeline_mode<synchronous>, transform_indices = @transform_1, window_bounds = array<i64: 32, 128>}, {pipeline_mode = #tpu.pipeline_mode<synchronous>, transform_indices = @transform_2, window_bounds = array<i64: 1, 128>}, {pipeline_mode = #tpu.pipeline_mode<synchronous>, transform_indices = @transform_3, window_bounds = array<i64: 128, 128>}, {pipeline_mode = #tpu.pipeline_mode<synchronous>, transform_indices = @transform_4, window_bounds = array<i64: 1, 128>}, {pipeline_mode = #tpu.pipeline_mode<synchronous>, transform_indices = @transform_5, window_bounds = array<i64: 128, 128>}, {pipeline_mode = #tpu.pipeline_mode<synchronous>, transform_indices = @transform_6, window_bounds = array<i64: 1, 128>}, {transform_indices = @transform_7, window_bounds = array<i64: 8, 128>}]} {
    %c0 = arith.constant 0 : index
    %c0_0 = arith.constant 0 : index
    %0 = vector.load %arg1[%c0, %c0_0] : memref<8x32xf32, #tpu.memory_space<vmem>>, vector<8x32xf32>
    %c0_1 = arith.constant 0 : index
    %c0_2 = arith.constant 0 : index
    %1 = vector.load %arg2[%c0_1, %c0_2] : memref<32x128xf32, #tpu.memory_space<vmem>>, vector<32x128xf32>
    %c0_3 = arith.constant 0 : index
    %c0_4 = arith.constant 0 : index
    %2 = vector.load %arg3[%c0_3, %c0_4] : memref<1x128xf32, #tpu.memory_space<vmem>>, vector<1x128xf32>
    %cst = arith.constant dense<0.000000e+00> : vector<8x128xf32>
    %3 = tpu.matmul %0, %1, %cst {dimension_numbers = #tpu.dot_dimension_numbers<[1], [0], [0], [1], [0, 0, 1, 1], [], []>} : vector<8x32xf32>, vector<32x128xf32>, vector<8x128xf32> -> vector<8x128xf32>
    %4 = vector.broadcast %2 : vector<1x128xf32> to vector<8x128xf32>
    %5 = arith.addf %3, %4 : vector<8x128xf32>
    %cst_5 = arith.constant 0.000000e+00 : f32
    %6 = vector.broadcast %cst_5 : f32 to vector<8x128xf32>
    %7 = arith.maximumf %5, %6 : vector<8x128xf32>
    %c0_6 = arith.constant 0 : index
    %c0_7 = arith.constant 0 : index
    %8 = vector.load %arg4[%c0_6, %c0_7] : memref<128x128xf32, #tpu.memory_space<vmem>>, vector<128x128xf32>
    %c0_8 = arith.constant 0 : index
    %c0_9 = arith.constant 0 : index
    %9 = vector.load %arg5[%c0_8, %c0_9] : memref<1x128xf32, #tpu.memory_space<vmem>>, vector<1x128xf32>
    %cst_10 = arith.constant dense<0.000000e+00> : vector<8x128xf32>
    %10 = tpu.matmul %7, %8, %cst_10 {dimension_numbers = #tpu.dot_dimension_numbers<[1], [0], [0], [1], [0, 0, 1, 1], [], []>} : vector<8x128xf32>, vector<128x128xf32>, vector<8x128xf32> -> vector<8x128xf32>
    %11 = vector.broadcast %9 : vector<1x128xf32> to vector<8x128xf32>
    %12 = arith.addf %10, %11 : vector<8x128xf32>
    %cst_11 = arith.constant 0.000000e+00 : f32
    %13 = vector.broadcast %cst_11 : f32 to vector<8x128xf32>
    %14 = arith.maximumf %12, %13 : vector<8x128xf32>
    %c0_12 = arith.constant 0 : index
    %c0_13 = arith.constant 0 : index
    %15 = vector.load %arg6[%c0_12, %c0_13] : memref<128x128xf32, #tpu.memory_space<vmem>>, vector<128x128xf32>
    %c0_14 = arith.constant 0 : index
    %c0_15 = arith.constant 0 : index
    %16 = vector.load %arg7[%c0_14, %c0_15] : memref<1x128xf32, #tpu.memory_space<vmem>>, vector<1x128xf32>
    %cst_16 = arith.constant dense<0.000000e+00> : vector<8x128xf32>
    %17 = tpu.matmul %14, %15, %cst_16 {dimension_numbers = #tpu.dot_dimension_numbers<[1], [0], [0], [1], [0, 0, 1, 1], [], []>} : vector<8x128xf32>, vector<128x128xf32>, vector<8x128xf32> -> vector<8x128xf32>
    %18 = vector.broadcast %16 : vector<1x128xf32> to vector<8x128xf32>
    %19 = arith.addf %17, %18 : vector<8x128xf32>
    %c0_17 = arith.constant 0 : index
    %c0_18 = arith.constant 0 : index
    %20 = vector.load %arg8[%c0_17, %c0_18] : memref<8x128xf32, #tpu.memory_space<vmem>>, vector<8x128xf32>
    tpu.vector_store %arg8[%c0_17, %c0_18], %19 {strides = array<i32>} : memref<8x128xf32, #tpu.memory_space<vmem>>, vector<8x128xf32>,
    return
  }
  func.func @transform_0(%arg0: i32) -> (i32, i32) {
    %c0_i32 = arith.constant 0 : i32
    %c0_i32_0 = arith.constant 0 : i32
    return %arg0, %c0_i32 : i32, i32
  }
  func.func @transform_1(%arg0: i32) -> (i32, i32) {
    %c0_i32 = arith.constant 0 : i32
    %c0_i32_0 = arith.constant 0 : i32
    %c0_i32_1 = arith.constant 0 : i32
    return %c0_i32, %c0_i32_0 : i32, i32
  }
  func.func @transform_2(%arg0: i32) -> (i32, i32) {
    %c0_i32 = arith.constant 0 : i32
    %c0_i32_0 = arith.constant 0 : i32
    %c0_i32_1 = arith.constant 0 : i32
    return %c0_i32, %c0_i32_0 : i32, i32
  }
  func.func @transform_3(%arg0: i32) -> (i32, i32) {
    %c0_i32 = arith.constant 0 : i32
    %c0_i32_0 = arith.constant 0 : i32
    %c0_i32_1 = arith.constant 0 : i32
    return %c0_i32, %c0_i32_0 : i32, i32
  }
  func.func @transform_4(%arg0: i32) -> (i32, i32) {
    %c0_i32 = arith.constant 0 : i32
    %c0_i32_0 = arith.constant 0 : i32
    %c0_i32_1 = arith.constant 0 : i32
    return %c0_i32, %c0_i32_0 : i32, i32
  }
  func.func @transform_5(%arg0: i32) -> (i32, i32) {
    %c0_i32 = arith.constant 0 : i32
    %c0_i32_0 = arith.constant 0 : i32
    %c0_i32_1 = arith.constant 0 : i32
    return %c0_i32, %c0_i32_0 : i32, i32
  }
  func.func @transform_6(%arg0: i32) -> (i32, i32) {
    %c0_i32 = arith.constant 0 : i32
    %c0_i32_0 = arith.constant 0 : i32
    %c0_i32_1 = arith.constant 0 : i32
    return %c0_i32, %c0_i32_0 : i32, i32
  }
  func.func @transform_7(%arg0: i32) -> (i32, i32) {
    %c0_i32 = arith.constant 0 : i32
    %c0_i32_0 = arith.constant 0 : i32
    return %arg0, %c0_i32 : i32, i32
  }
}

module attributes {stable_mosaic.version = 11 : i64} {
  func.func @kernel(%arg0: i32, %arg1: memref<8x32xf32, #tpu.memory_space<vmem>>, %arg2: memref<32x128xf32, #tpu.memory_space<vmem>>, %arg3: memref<1x128xf32, #tpu.memory_space<vmem>>, %arg4: memref<128x128xf32, #tpu.memory_space<vmem>>, %arg5: memref<1x128xf32, #tpu.memory_space<vmem>>, %arg6: memref<128x128xf32, #tpu.memory_space<vmem>>, %arg7: memref<1x128xf32, #tpu.memory_space<vmem>>, %arg8: memref<8x128xf32, #tpu.memory_space<vmem>>) attributes {dimension_semantics = [#tpu.dimension_semantics<parallel>], iteration_bounds = array<i64: 1>, scalar_prefetch = 0 : i64, scratch_operands = 0 : i64, tpu.core_type = #tpu.core_type<tc>, window_params = [{transform_indices = @transform_0, window_bounds = array<i64: 8, 32>}, {pipeline_mode = #tpu.pipeline_mode<synchronous>, transform_indices = @transform_1, window_bounds = array<i64: 32, 128>}, {pipeline_mode = #tpu.pipeline_mode<synchronous>, transform_indices = @transform_2, window_bounds = array<i64: 1, 128>}, {pipeline_mode = #tpu.pipeline_mode<synchronous>, transform_indices = @transform_3, window_bounds = array<i64: 128, 128>}, {pipeline_mode = #tpu.pipeline_mode<synchronous>, transform_indices = @transform_4, window_bounds = array<i64: 1, 128>}, {pipeline_mode = #tpu.pipeline_mode<synchronous>, transform_indices = @transform_5, window_bounds = array<i64: 128, 128>}, {pipeline_mode = #tpu.pipeline_mode<synchronous>, transform_indices = @transform_6, window_bounds = array<i64: 1, 128>}, {transform_indices = @transform_7, window_bounds = array<i64: 8, 128>}]} {
    %c0 = arith.constant 0 : index
    %c0_0 = arith.constant 0 : index
    %0 = vector.load %arg1[%c0, %c0_0] : memref<8x32xf32, #tpu.memory_space<vmem>>, vector<8x32xf32>
    %c0_1 = arith.constant 0 : index
    %c0_2 = arith.constant 0 : index
    %1 = vector.load %arg2[%c0_1, %c0_2] : memref<32x128xf32, #tpu.memory_space<vmem>>, vector<32x128xf32>
    %c0_3 = arith.constant 0 : index
    %c0_4 = arith.constant 0 : index
    %2 = vector.load %arg3[%c0_3, %c0_4] : memref<1x128xf32, #tpu.memory_space<vmem>>, vector<1x128xf32>
    %cst = arith.constant dense<0.000000e+00> : vector<8x128xf32>
    %3 = tpu.matmul %0, %1, %cst {dimension_numbers = #tpu.dot_dimension_numbers<[1], [0], [0], [1], [0, 0, 1, 1], [], []>} : vector<8x32xf32>, vector<32x128xf32>, vector<8x128xf32> -> vector<8x128xf32>
    %4 = vector.broadcast %2 : vector<1x128xf32> to vector<8x128xf32>
    %5 = arith.addf %3, %4 : vector<8x128xf32>
    %cst_5 = arith.constant 0.000000e+00 : f32
    %6 = vector.broadcast %cst_5 : f32 to vector<8x128xf32>
    %7 = arith.maximumf %5, %6 : vector<8x128xf32>
    %c0_6 = arith.constant 0 : index
    %c0_7 = arith.constant 0 : index
    %8 = vector.load %arg4[%c0_6, %c0_7] : memref<128x128xf32, #tpu.memory_space<vmem>>, vector<128x128xf32>
    %c0_8 = arith.constant 0 : index
    %c0_9 = arith.constant 0 : index
    %9 = vector.load %arg5[%c0_8, %c0_9] : memref<1x128xf32, #tpu.memory_space<vmem>>, vector<1x128xf32>
    %cst_10 = arith.constant dense<0.000000e+00> : vector<8x128xf32>
    %10 = tpu.matmul %7, %8, %cst_10 {dimension_numbers = #tpu.dot_dimension_numbers<[1], [0], [0], [1], [0, 0, 1, 1], [], []>} : vector<8x128xf32>, vector<128x128xf32>, vector<8x128xf32> -> vector<8x128xf32>
    %11 = vector.broadcast %9 : vector<1x128xf32> to vector<8x128xf32>
    %12 = arith.addf %10, %11 : vector<8x128xf32>
    %cst_11 = arith.constant 0.000000e+00 : f32
    %13 = vector.broadcast %cst_11 : f32 to vector<8x128xf32>
    %14 = arith.maximumf %12, %13 : vector<8x128xf32>
    %c0_12 = arith.constant 0 : index
    %c0_13 = arith.constant 0 : index
    %15 = vector.load %arg6[%c0_12, %c0_13] : memref<128x128xf32, #tpu.memory_space<vmem>>, vector<128x128xf32>
    %c0_14 = arith.constant 0 : index
    %c0_15 = arith.constant 0 : index
    %16 = vector.load %arg7[%c0_14, %c0_15] : memref<1x128xf32, #tpu.memory_space<vmem>>, vector<1x128xf32>
    %cst_16 = arith.constant dense<0.000000e+00> : vector<8x128xf32>
    %17 = tpu.matmul %14, %15, %cst_16 {dimension_numbers = #tpu.dot_dimension_numbers<[1], [0], [0], [1], [0, 0, 1, 1], [], []>} : vector<8x128xf32>, vector<128x128xf32>, vector<8x128xf32> -> vector<8x128xf32>
    %18 = vector.broadcast %16 : vector<1x128xf32> to vector<8x128xf32>
    %19 = arith.addf %17, %18 : vector<8x128xf32>
    %c0_17 = arith.constant 0 : index
    %c0_18 = arith.constant 0 : index
    %20 = vector.load %arg8[%c0_17, %c0_18] : memref<8x128xf32, #tpu.memory_space<vmem>>, vector<8x128xf32>
    tpu.vector_store %arg8[%c0_17, %c0_18], %19 {strides = array<i32>} : memref<8x128xf32, #tpu.memory_space<vmem>>, vector<8x128xf32>,
    return
  }
  func.func @transform_0(%arg0: i32) -> (i32, i32) {
    %c0_i32 = arith.constant 0 : i32
    %c0_i32_0 = arith.constant 0 : i32
    return %arg0, %c0_i32 : i32, i32
  }
  func.func @transform_1(%arg0: i32) -> (i32, i32) {
    %c0_i32 = arith.constant 0 : i32
    %c0_i32_0 = arith.constant 0 : i32
    %c0_i32_1 = arith.constant 0 : i32
    return %c0_i32, %c0_i32_0 : i32, i32
  }
  func.func @transform_2(%arg0: i32) -> (i32, i32) {
    %c0_i32 = arith.constant 0 : i32
    %c0_i32_0 = arith.constant 0 : i32
    %c0_i32_1 = arith.constant 0 : i32
    return %c0_i32, %c0_i32_0 : i32, i32
  }
  func.func @transform_3(%arg0: i32) -> (i32, i32) {
    %c0_i32 = arith.constant 0 : i32
    %c0_i32_0 = arith.constant 0 : i32
    %c0_i32_1 = arith.constant 0 : i32
    return %c0_i32, %c0_i32_0 : i32, i32
  }
  func.func @transform_4(%arg0: i32) -> (i32, i32) {
    %c0_i32 = arith.constant 0 : i32
    %c0_i32_0 = arith.constant 0 : i32
    %c0_i32_1 = arith.constant 0 : i32
    return %c0_i32, %c0_i32_0 : i32, i32
  }
  func.func @transform_5(%arg0: i32) -> (i32, i32) {
    %c0_i32 = arith.constant 0 : i32
    %c0_i32_0 = arith.constant 0 : i32
    %c0_i32_1 = arith.constant 0 : i32
    return %c0_i32, %c0_i32_0 : i32, i32
  }
  func.func @transform_6(%arg0: i32) -> (i32, i32) {
    %c0_i32 = arith.constant 0 : i32
    %c0_i32_0 = arith.constant 0 : i32
    %c0_i32_1 = arith.constant 0 : i32
    return %c0_i32, %c0_i32_0 : i32, i32
  }
  func.func @transform_7(%arg0: i32) -> (i32, i32) {
    %c0_i32 = arith.constant 0 : i32
    %c0_i32_0 = arith.constant 0 : i32
    return %arg0, %c0_i32 : i32, i32
  }
}

</mosaic_0001>

<llo_original>
// kernel: tpu_custom_call.1
$region0: #{tpu_custom_call.1}
  #allocation0 [shape = 'u32[]', space=smem, size = 0x4, offset = 0x4, fixed_abs, tag = 'smem constant byte address 0x4 - core index']
  #allocation1 [shape = 'u32[144,128]{1,0:T(1,128)}', space=vmem, size = 0x12000, scoped, tag = 'internal scratch']
  %s0 = inlined_call_operand.hbm [shape: f32[8,32], index: 0, kind: input, shape index: {}]
  %s1 = inlined_call_operand.hbm [shape: f32[32,128], index: 1, kind: input, shape index: {}]
  %s2 = inlined_call_operand.vmem [shape: f32[1,128], index: 2, kind: input, shape index: {}]
  %s3 = inlined_call_operand.hbm [shape: f32[128,128], index: 3, kind: input, shape index: {}]
  %s4 = inlined_call_operand.vmem [shape: f32[1,128], index: 4, kind: input, shape index: {}]
  %s5 = inlined_call_operand.hbm [shape: f32[128,128], index: 5, kind: input, shape index: {}]
  %s6 = inlined_call_operand.vmem [shape: f32[1,128], index: 6, kind: input, shape index: {}]
  %s7 = inlined_call_operand.hbm [shape: f32[8,128], index: 7, kind: output, shape index: {}]
  %s8 = sld [smem:[#allocation0]]
  $region54: #{tpu_custom_call.1} parent=0
    _
  %s10 = ssub.s32 1, %s8
  %s11 = scalar_select 0, %s10, %s8
  $region1: #{tpu_custom_call.1} parent=0
    #allocation2 [shape = 'u8[4096]{0}', space=vmem, size = 0x1000, scoped, tag = 'input window, operand 0, single buffered']
    #allocation3 [shape = 's32[1]{0}', space=sflag, size = 0x4, scoped, tag = 'scoped memory for tpu_custom_call.1']
    #allocation4 [shape = 's32[1]{0}', space=sflag, size = 0x4, scoped, tag = 'scoped memory for tpu_custom_call.1']
    #allocation5 [shape = 'u8[16384]{0}', space=vmem, size = 0x4000, scoped, tag = 'input window, operand 1, single buffered']
    #allocation6 [shape = 's32[1]{0}', space=sflag, size = 0x4, scoped, tag = 'scoped memory for tpu_custom_call.1']
    #allocation7 [shape = 'u8[65536]{0}', space=vmem, size = 0x10000, scoped, tag = 'input window, operand 3, single buffered']
    #allocation8 [shape = 'u8[65536]{0}', space=vmem, size = 0x10000, scoped, tag = 'input window, operand 5, single buffered']
    #allocation9 [shape = 's32[1]{0}', space=sflag, size = 0x4, scoped, tag = 'scoped memory for tpu_custom_call.1']
    #allocation10 [shape = 'u8[4096]{0}', space=vmem, size = 0x1000, scoped, tag = 'output window, operand 0, single buffered']
    %12 = vsyncpa [#allocation3], 0
    %13 = vsyncpa [#allocation6], 0
    %14 = vsyncpa [#allocation9], 0
    %15 = vsyncpa [#allocation4], 0
    // Predicated region
    $region2: #{tpu_custom_call.1} parent=1 // pred_check
      _
    $region3: #{tpu_custom_call.1} parent=1 // pred_check_branch
      %17 = sbr.rel (0) target = $region5
    $region4: #{tpu_custom_call.1} parent=1 // pred_region
      %s19 = ssub.s32 128, 128
      %20 = vsyncadd [#allocation3], %s19
      %s22 = sshll.u32 [#allocation2], 4
      %s23 = int_to_ptr.vmem [resolvable:$true] %s22
      %25 = dma.hbm_to_vmem [thread:$0]  %s0, 128, %s23, [#allocation3]
    $region5: #{tpu_custom_call.1} parent=1 // pred_fallthru
      _
    // Predicated region
    $region6: #{tpu_custom_call.1} parent=1 // pred_check
      _
    $region7: #{tpu_custom_call.1} parent=1 // pred_check_branch
      %27 = sbr.rel (0) target = $region9
    $region8: #{tpu_custom_call.1} parent=1 // pred_region
      %s29 = ssub.s32 512, 512
      %30 = vsyncadd [#allocation6], %s29
      %s31 = sshll.u32 [#allocation5], 4
      %s32 = int_to_ptr.vmem [resolvable:$true] %s31
      %37 = dma.hbm_to_vmem [thread:$0]  %s1, 512, %s32, [#allocation6], 128, 128, 8
    $region9: #{tpu_custom_call.1} parent=1 // pred_fallthru
      _
    // Predicated region
    $region10: #{tpu_custom_call.1} parent=1 // pred_check
      _
    $region11: #{tpu_custom_call.1} parent=1 // pred_check_branch
      %39 = sbr.rel (0) target = $region13
    $region12: #{tpu_custom_call.1} parent=1 // pred_region
      _
    $region13: #{tpu_custom_call.1} parent=1 // pred_fallthru
      _
    // Predicated region
    $region14: #{tpu_custom_call.1} parent=1 // pred_check
      _
    $region15: #{tpu_custom_call.1} parent=1 // pred_check_branch
      %41 = sbr.rel (0) target = $region17
    $region16: #{tpu_custom_call.1} parent=1 // pred_region
      %s43 = ssub.s32 2048, 2048
      %44 = vsyncadd [#allocation6], %s43
      %s45 = sshll.u32 [#allocation7], 4
      %s46 = int_to_ptr.vmem [resolvable:$true] %s45
      %51 = dma.hbm_to_vmem [thread:$0]  %s3, 2048, %s46, [#allocation6], 128, 128, 8
    $region17: #{tpu_custom_call.1} parent=1 // pred_fallthru
      _
    // Predicated region
    $region18: #{tpu_custom_call.1} parent=1 // pred_check
      _
    $region19: #{tpu_custom_call.1} parent=1 // pred_check_branch
      %53 = sbr.rel (0) target = $region21
    $region20: #{tpu_custom_call.1} parent=1 // pred_region
      _
    $region21: #{tpu_custom_call.1} parent=1 // pred_fallthru
      _
    // Predicated region
    $region22: #{tpu_custom_call.1} parent=1 // pred_check
      _
    $region23: #{tpu_custom_call.1} parent=1 // pred_check_branch
      %55 = sbr.rel (0) target = $region25
    $region24: #{tpu_custom_call.1} parent=1 // pred_region
      %s57 = ssub.s32 2048, 2048
      %58 = vsyncadd [#allocation9], %s57
      %s59 = sshll.u32 [#allocation8], 4
      %s60 = int_to_ptr.vmem [resolvable:$true] %s59
      %65 = dma.hbm_to_vmem [thread:$0]  %s5, 2048, %s60, [#allocation9], 128, 128, 8
    $region25: #{tpu_custom_call.1} parent=1 // pred_fallthru
      _
    // Predicated region
    $region26: #{tpu_custom_call.1} parent=1 // pred_check
      _
    $region27: #{tpu_custom_call.1} parent=1 // pred_check_branch
      %67 = sbr.rel (0) target = $region29
    $region28: #{tpu_custom_call.1} parent=1 // pred_region
      _
    $region29: #{tpu_custom_call.1} parent=1 // pred_fallthru
      _
    // Predicated region
    $region30: #{tpu_custom_call.1} parent=1 // pred_check
      _
    $region31: #{tpu_custom_call.1} parent=1 // pred_check_branch
      %69 = sbr.rel (0) target = $region33
    $region32: #{tpu_custom_call.1} parent=1 // pred_region
      %70 = dma.done [#allocation3], 128
    $region33: #{tpu_custom_call.1} parent=1 // pred_fallthru
      _
    // Predicated region
    $region34: #{tpu_custom_call.1} parent=1 // pred_check
      _
    $region35: #{tpu_custom_call.1} parent=1 // pred_check_branch
      %72 = sbr.rel (0) target = $region37
    $region36: #{tpu_custom_call.1} parent=1 // pred_region
      %73 = dma.done [#allocation6], 512
    $region37: #{tpu_custom_call.1} parent=1 // pred_fallthru
      _
    // Predicated region
    $region38: #{tpu_custom_call.1} parent=1 // pred_check
      _
    $region39: #{tpu_custom_call.1} parent=1 // pred_check_branch
      %75 = sbr.rel (0) target = $region41
    $region40: #{tpu_custom_call.1} parent=1 // pred_region
      %76 = dma.done [#allocation6], 2048
    $region41: #{tpu_custom_call.1} parent=1 // pred_fallthru
      _
    // Predicated region
    $region42: #{tpu_custom_call.1} parent=1 // pred_check
      _
    $region43: #{tpu_custom_call.1} parent=1 // pred_check_branch
      %78 = sbr.rel (0) target = $region45
    $region44: #{tpu_custom_call.1} parent=1 // pred_region
      %79 = dma.done [#allocation9], 2048
    $region45: #{tpu_custom_call.1} parent=1 // pred_fallthru
      _
    %v80 = vld [vmem:[#allocation2] sm:$0xff]
    %v81 = vld [vmem:[#allocation5] sm:$0xff]
    %v82 = vld [vmem:[#allocation5 + $0x8] sm:$0xff]
    %v83 = vld [vmem:[#allocation5 + $0x10] sm:$0xff]
    %v84 = vld [vmem:[#allocation5 + $0x18] sm:$0xff]
    %v85 = vld [vmem:[%s2] sm:$0x1]
    %v87 = vlaneseq
    %v88 = vshrl.u32 %v87, 7
    %v89 = vsub.s32 0, %v88
    %v90 = vrot.slane %v85, %v89
    %vm92 = vcmask 261120
    %v94 = vsel %vm92, %v80, 0
    %96 = vmatprep.subr.mxu0 0.0
    %97 = vmatpush1.msra.mxu0 0.0
    %98 = vmatprep.subr.mxu0 0.0
    %99 = vmatpush1.msra.mxu0 0.0
    %100 = vmatprep.subr.mxu0 0.0
    %101 = vmatpush1.msra.mxu0 0.0
    %102 = vmatprep.subr.mxu0 0.0
    %103 = vmatpush1.msra.mxu0 0.0
    %104 = vmatprep.subr.mxu0 0.0
    %105 = vmatpush1.msra.mxu0 0.0
    %106 = vmatprep.subr.mxu0 0.0
    %107 = vmatpush1.msra.mxu0 0.0
    %108 = vmatprep.subr.mxu0 0.0
    %109 = vmatpush1.msra.mxu0 0.0
    %110 = vmatprep.subr.mxu0 0.0
    %111 = vmatpush1.msra.mxu0 0.0
    %112 = vmatprep.subr.mxu0 0.0
    %113 = vmatpush1.msra.mxu0 0.0
    %114 = vmatprep.subr.mxu0 0.0
    %115 = vmatpush1.msra.mxu0 0.0
    %116 = vmatprep.subr.mxu0 0.0
    %117 = vmatpush1.msra.mxu0 0.0
    %118 = vmatprep.subr.mxu0 0.0
    %119 = vmatpush1.msra.mxu0 0.0
    %120 = vmatprep.subr.mxu0 0.0
    %121 = vmatpush1.msra.mxu0 %v84
    %122 = vmatprep.subr.mxu0 0.0
    %123 = vmatpush1.msra.mxu0 %v83
    %124 = vmatprep.subr.mxu0 0.0
    %125 = vmatpush1.msra.mxu0 %v82
    %126 = vmatprep.subr.mxu0 0.0
    %127 = vmatpush1.msra.mxu0 %v81
    %128 = vmatprep.subr.mxu0 0.0
    %129 = vmatpush2.msra.mxu0 0.0
    %130 = vmatprep.subr.mxu0 0.0
    %131 = vmatpush2.msra.mxu0 0.0
    %132 = vmatprep.subr.mxu0 0.0
    %133 = vmatpush2.msra.mxu0 0.0
    %134 = vmatprep.subr.mxu0 0.0
    %135 = vmatpush2.msra.mxu0 0.0
    %136 = vmatprep.subr.mxu0 0.0
    %137 = vmatpush2.msra.mxu0 0.0
    %138 = vmatprep.subr.mxu0 0.0
    %139 = vmatpush2.msra.mxu0 0.0
    %140 = vmatprep.subr.mxu0 0.0
    %141 = vmatpush2.msra.mxu0 0.0
    %142 = vmatprep.subr.mxu0 0.0
    %143 = vmatpush2.msra.mxu0 0.0
    %144 = vmatprep.subr.mxu0 0.0
    %145 = vmatpush2.msra.mxu0 0.0
    %146 = vmatprep.subr.mxu0 0.0
    %147 = vmatpush2.msra.mxu0 0.0
    %148 = vmatprep.subr.mxu0 0.0
    %149 = vmatpush2.msra.mxu0 0.0
    %150 = vmatprep.subr.mxu0 0.0
    %151 = vmatpush2.msra.mxu0 0.0
    %152 = vmatprep.subr.mxu0 0.0
    %153 = vmatpush2.msra.mxu0 0.0
    %154 = vmatprep.subr.mxu0 0.0
    %155 = vmatpush2.msra.mxu0 0.0
    %156 = vmatprep.subr.mxu0 0.0
    %157 = vmatpush2.msra.mxu0 0.0
    %158 = vmatprep.subr.mxu0 0.0
    %159 = vmatpush2.msra.mxu0 0.0
    %160 = vmatprep.mubr.f32.mxu0 0.0
    %161 = vmatmul.mubr.f32.gmra.mxu0 %v94
    %v162 = vpop.f32.mrf.mxu0
    %v163 = vadd.f32 %v90, %v162
    %v164 = vpop.f32.mrf.mxu0
    %165 = vdwg.mxu0
    %v166 = vmax.f32 %v163, 0.0
    %v167 = vld [vmem:[#allocation7] sm:$0xff]
    %v168 = vld [vmem:[#allocation7 + $0x8] sm:$0xff]
    %v169 = vld [vmem:[#allocation7 + $0x10] sm:$0xff]
    %v170 = vld [vmem:[#allocation7 + $0x18] sm:$0xff]
    %v171 = vld [vmem:[#allocation7 + $0x20] sm:$0xff]
    %v172 = vld [vmem:[#allocation7 + $0x28] sm:$0xff]
    %v173 = vld [vmem:[#allocation7 + $0x30] sm:$0xff]
    %v174 = vld [vmem:[#allocation7 + $0x38] sm:$0xff]
    %v175 = vld [vmem:[#allocation7 + $0x40] sm:$0xff]
    %v176 = vld [vmem:[#allocation7 + $0x48] sm:$0xff]
    %v177 = vld [vmem:[#allocation7 + $0x50] sm:$0xff]
    %v178 = vld [vmem:[#allocation7 + $0x58] sm:$0xff]
    %v179 = vld [vmem:[#allocation7 + $0x60] sm:$0xff]
    %v180 = vld [vmem:[#allocation7 + $0x68] sm:$0xff]
    %v181 = vld [vmem:[#allocation7 + $0x70] sm:$0xff]
    %v182 = vld [vmem:[#allocation7 + $0x78] sm:$0xff]
    %v183 = vld [vmem:[%s4] sm:$0x1]
    %v185 = vlaneseq
    %v186 = vshrl.u32 %v185, 7
    %v187 = vsub.s32 0, %v186
    %v188 = vrot.slane %v183, %v187
    %190 = vmatprep.subr.mxu0 0.0
    %191 = vmatpush1.msra.mxu0 %v182
    %192 = vmatprep.subr.mxu0 0.0
    %193 = vmatpush1.msra.mxu0 %v181
    %194 = vmatprep.subr.mxu0 0.0
    %195 = vmatpush1.msra.mxu0 %v180
    %196 = vmatprep.subr.mxu0 0.0
    %197 = vmatpush1.msra.mxu0 %v179
    %198 = vmatprep.subr.mxu0 0.0
    %199 = vmatpush1.msra.mxu0 %v178
    %200 = vmatprep.subr.mxu0 0.0
    %201 = vmatpush1.msra.mxu0 %v177
    %202 = vmatprep.subr.mxu0 0.0
    %203 = vmatpush1.msra.mxu0 %v176
    %204 = vmatprep.subr.mxu0 0.0
    %205 = vmatpush1.msra.mxu0 %v175
    %206 = vmatprep.subr.mxu0 0.0
    %207 = vmatpush1.msra.mxu0 %v174
    %208 = vmatprep.subr.mxu0 0.0
    %209 = vmatpush1.msra.mxu0 %v173
    %210 = vmatprep.subr.mxu0 0.0
    %211 = vmatpush1.msra.mxu0 %v172
    %212 = vmatprep.subr.mxu0 0.0
    %213 = vmatpush1.msra.mxu0 %v171
    %214 = vmatprep.subr.mxu0 0.0
    %215 = vmatpush1.msra.mxu0 %v170
    %216 = vmatprep.subr.mxu0 0.0
    %217 = vmatpush1.msra.mxu0 %v169
    %218 = vmatprep.subr.mxu0 0.0
    %219 = vmatpush1.msra.mxu0 %v168
    %220 = vmatprep.subr.mxu0 0.0
    %221 = vmatpush1.msra.mxu0 %v167
    %222 = vmatprep.subr.mxu0 0.0
    %223 = vmatpush2.msra.mxu0 0.0
    %224 = vmatprep.subr.mxu0 0.0
    %225 = vmatpush2.msra.mxu0 0.0
    %226 = vmatprep.subr.mxu0 0.0
    %227 = vmatpush2.msra.mxu0 0.0
    %228 = vmatprep.subr.mxu0 0.0
    %229 = vmatpush2.msra.mxu0 0.0
    %230 = vmatprep.subr.mxu0 0.0
    %231 = vmatpush2.msra.mxu0 0.0
    %232 = vmatprep.subr.mxu0 0.0
    %233 = vmatpush2.msra.mxu0 0.0
    %234 = vmatprep.subr.mxu0 0.0
    %235 = vmatpush2.msra.mxu0 0.0
    %236 = vmatprep.subr.mxu0 0.0
    %237 = vmatpush2.msra.mxu0 0.0
    %238 = vmatprep.subr.mxu0 0.0
    %239 = vmatpush2.msra.mxu0 0.0
    %240 = vmatprep.subr.mxu0 0.0
    %241 = vmatpush2.msra.mxu0 0.0
    %242 = vmatprep.subr.mxu0 0.0
    %243 = vmatpush2.msra.mxu0 0.0
    %244 = vmatprep.subr.mxu0 0.0
    %245 = vmatpush2.msra.mxu0 0.0
    %246 = vmatprep.subr.mxu0 0.0
    %247 = vmatpush2.msra.mxu0 0.0
    %248 = vmatprep.subr.mxu0 0.0
    %249 = vmatpush2.msra.mxu0 0.0
    %250 = vmatprep.subr.mxu0 0.0
    %251 = vmatpush2.msra.mxu0 0.0
    %252 = vmatprep.subr.mxu0 0.0
    %253 = vmatpush2.msra.mxu0 0.0
    %254 = vmatprep.mubr.f32.mxu0 0.0
    %255 = vmatmul.mubr.f32.gmra.mxu0 %v166
    %v256 = vpop.f32.mrf.mxu0
    %v257 = vadd.f32 %v188, %v256
    %v258 = vpop.f32.mrf.mxu0
    %259 = vdwg.mxu0
    %v260 = vmax.f32 %v257, 0.0
    %v261 = vld [vmem:[#allocation8] sm:$0xff]
    %v262 = vld [vmem:[#allocation8 + $0x8] sm:$0xff]
    %v263 = vld [vmem:[#allocation8 + $0x10] sm:$0xff]
    %v264 = vld [vmem:[#allocation8 + $0x18] sm:$0xff]
    %v265 = vld [vmem:[#allocation8 + $0x20] sm:$0xff]
    %v266 = vld [vmem:[#allocation8 + $0x28] sm:$0xff]
    %v267 = vld [vmem:[#allocation8 + $0x30] sm:$0xff]
    %v268 = vld [vmem:[#allocation8 + $0x38] sm:$0xff]
    %v269 = vld [vmem:[#allocation8 + $0x40] sm:$0xff]
    %v270 = vld [vmem:[#allocation8 + $0x48] sm:$0xff]
    %v271 = vld [vmem:[#allocation8 + $0x50] sm:$0xff]
    %v272 = vld [vmem:[#allocation8 + $0x58] sm:$0xff]
    %v273 = vld [vmem:[#allocation8 + $0x60] sm:$0xff]
    %v274 = vld [vmem:[#allocation8 + $0x68] sm:$0xff]
    %v275 = vld [vmem:[#allocation8 + $0x70] sm:$0xff]
    %v276 = vld [vmem:[#allocation8 + $0x78] sm:$0xff]
    %v277 = vld [vmem:[%s6] sm:$0x1]
    %v279 = vlaneseq
    %v280 = vshrl.u32 %v279, 7
    %v281 = vsub.s32 0, %v280
    %v282 = vrot.slane %v277, %v281
    %284 = vmatprep.subr.mxu0 0.0
    %285 = vmatpush1.msra.mxu0 %v276
    %286 = vmatprep.subr.mxu0 0.0
    %287 = vmatpush1.msra.mxu0 %v275
    %288 = vmatprep.subr.mxu0 0.0
    %289 = vmatpush1.msra.mxu0 %v274
    %290 = vmatprep.subr.mxu0 0.0
    %291 = vmatpush1.msra.mxu0 %v273
    %292 = vmatprep.subr.mxu0 0.0
    %293 = vmatpush1.msra.mxu0 %v272
    %294 = vmatprep.subr.mxu0 0.0
    %295 = vmatpush1.msra.mxu0 %v271
    %296 = vmatprep.subr.mxu0 0.0
    %297 = vmatpush1.msra.mxu0 %v270
    %298 = vmatprep.subr.mxu0 0.0
    %299 = vmatpush1.msra.mxu0 %v269
    %300 = vmatprep.subr.mxu0 0.0
    %301 = vmatpush1.msra.mxu0 %v268
    %302 = vmatprep.subr.mxu0 0.0
    %303 = vmatpush1.msra.mxu0 %v267
    %304 = vmatprep.subr.mxu0 0.0
    %305 = vmatpush1.msra.mxu0 %v266
    %306 = vmatprep.subr.mxu0 0.0
    %307 = vmatpush1.msra.mxu0 %v265
    %308 = vmatprep.subr.mxu0 0.0
    %309 = vmatpush1.msra.mxu0 %v264
    %310 = vmatprep.subr.mxu0 0.0
    %311 = vmatpush1.msra.mxu0 %v263
    %312 = vmatprep.subr.mxu0 0.0
    %313 = vmatpush1.msra.mxu0 %v262
    %314 = vmatprep.subr.mxu0 0.0
    %315 = vmatpush1.msra.mxu0 %v261
    %316 = vmatprep.subr.mxu0 0.0
    %317 = vmatpush2.msra.mxu0 0.0
    %318 = vmatprep.subr.mxu0 0.0
    %319 = vmatpush2.msra.mxu0 0.0
    %320 = vmatprep.subr.mxu0 0.0
    %321 = vmatpush2.msra.mxu0 0.0
    %322 = vmatprep.subr.mxu0 0.0
    %323 = vmatpush2.msra.mxu0 0.0
    %324 = vmatprep.subr.mxu0 0.0
    %325 = vmatpush2.msra.mxu0 0.0
    %326 = vmatprep.subr.mxu0 0.0
    %327 = vmatpush2.msra.mxu0 0.0
    %328 = vmatprep.subr.mxu0 0.0
    %329 = vmatpush2.msra.mxu0 0.0
    %330 = vmatprep.subr.mxu0 0.0
    %331 = vmatpush2.msra.mxu0 0.0
    %332 = vmatprep.subr.mxu0 0.0
    %333 = vmatpush2.msra.mxu0 0.0
    %334 = vmatprep.subr.mxu0 0.0
    %335 = vmatpush2.msra.mxu0 0.0
    %336 = vmatprep.subr.mxu0 0.0
    %337 = vmatpush2.msra.mxu0 0.0
    %338 = vmatprep.subr.mxu0 0.0
    %339 = vmatpush2.msra.mxu0 0.0
    %340 = vmatprep.subr.mxu0 0.0
    %341 = vmatpush2.msra.mxu0 0.0
    %342 = vmatprep.subr.mxu0 0.0
    %343 = vmatpush2.msra.mxu0 0.0
    %344 = vmatprep.subr.mxu0 0.0
    %345 = vmatpush2.msra.mxu0 0.0
    %346 = vmatprep.subr.mxu0 0.0
    %347 = vmatpush2.msra.mxu0 0.0
    %348 = vmatprep.mubr.f32.mxu0 0.0
    %349 = vmatmul.mubr.f32.gmra.mxu0 %v260
    %v350 = vpop.f32.mrf.mxu0
    %v351 = vadd.f32 %v282, %v350
    %v352 = vpop.f32.mrf.mxu0
    %353 = vdwg.mxu0
    %354 = vst [vmem:[#allocation10] sm:$0xff] %v351
    // Predicated region
    $region46: #{tpu_custom_call.1} parent=1 // pred_check
      _
    $region47: #{tpu_custom_call.1} parent=1 // pred_check_branch
      %356 = sbr.rel (0) target = $region49
    $region48: #{tpu_custom_call.1} parent=1 // pred_region
      %s358 = ssub.s32 128, 128
      %359 = vsyncadd [#allocation4], %s358
      %s361 = sshll.u32 [#allocation10], 4
      %s362 = int_to_ptr.vmem [resolvable:$true] %s361
      %364 = dma.vmem_to_hbm [thread:$0]  %s362, 128, %s7, [#allocation4]
    $region49: #{tpu_custom_call.1} parent=1 // pred_fallthru
      _
    // Predicated region
    $region50: #{tpu_custom_call.1} parent=1 // pred_check
      _
    $region51: #{tpu_custom_call.1} parent=1 // pred_check_branch
      %366 = sbr.rel (0) target = $region53
    $region52: #{tpu_custom_call.1} parent=1 // pred_region
      %367 = dma.done [#allocation4], 128
    $region53: #{tpu_custom_call.1} parent=1 // pred_fallthru
      _
    %368 = vsyncpa [#allocation3], 1
    %369 = vsyncpa [#allocation6], 1
    %370 = vsyncpa [#allocation9], 1
    %371 = vsyncpa [#allocation4], 1

// kernel: tpu_custom_call.1
$region0: #{tpu_custom_call.1}
  #allocation0 [shape = 'u32[]', space=smem, size = 0x4, offset = 0x4, fixed_abs, tag = 'smem constant byte address 0x4 - core index']
  #allocation1 [shape = 'u32[144,128]{1,0:T(1,128)}', space=vmem, size = 0x12000, scoped, tag = 'internal scratch']
  %s0 = inlined_call_operand.hbm [shape: f32[8,32], index: 0, kind: input, shape index: {}]
  %s1 = inlined_call_operand.hbm [shape: f32[32,128], index: 1, kind: input, shape index: {}]
  %s2 = inlined_call_operand.vmem [shape: f32[1,128], index: 2, kind: input, shape index: {}]
  %s3 = inlined_call_operand.hbm [shape: f32[128,128], index: 3, kind: input, shape index: {}]
  %s4 = inlined_call_operand.vmem [shape: f32[1,128], index: 4, kind: input, shape index: {}]
  %s5 = inlined_call_operand.hbm [shape: f32[128,128], index: 5, kind: input, shape index: {}]
  %s6 = inlined_call_operand.vmem [shape: f32[1,128], index: 6, kind: input, shape index: {}]
  %s7 = inlined_call_operand.hbm [shape: f32[8,128], index: 7, kind: output, shape index: {}]
  %s8 = sld [smem:[#allocation0]]
  $region54: #{tpu_custom_call.1} parent=0
    _
  %s10 = ssub.s32 1, %s8
  %s11 = scalar_select 0, %s10, %s8
  $region1: #{tpu_custom_call.1} parent=0
    #allocation2 [shape = 'u8[4096]{0}', space=vmem, size = 0x1000, scoped, tag = 'input window, operand 0, single buffered']
    #allocation3 [shape = 's32[1]{0}', space=sflag, size = 0x4, scoped, tag = 'scoped memory for tpu_custom_call.1']
    #allocation4 [shape = 's32[1]{0}', space=sflag, size = 0x4, scoped, tag = 'scoped memory for tpu_custom_call.1']
    #allocation5 [shape = 'u8[16384]{0}', space=vmem, size = 0x4000, scoped, tag = 'input window, operand 1, single buffered']
    #allocation6 [shape = 's32[1]{0}', space=sflag, size = 0x4, scoped, tag = 'scoped memory for tpu_custom_call.1']
    #allocation7 [shape = 'u8[65536]{0}', space=vmem, size = 0x10000, scoped, tag = 'input window, operand 3, single buffered']
    #allocation8 [shape = 'u8[65536]{0}', space=vmem, size = 0x10000, scoped, tag = 'input window, operand 5, single buffered']
    #allocation9 [shape = 's32[1]{0}', space=sflag, size = 0x4, scoped, tag = 'scoped memory for tpu_custom_call.1']
    #allocation10 [shape = 'u8[4096]{0}', space=vmem, size = 0x1000, scoped, tag = 'output window, operand 0, single buffered']
    %12 = vsyncpa [#allocation3], 0
    %13 = vsyncpa [#allocation6], 0
    %14 = vsyncpa [#allocation9], 0
    %15 = vsyncpa [#allocation4], 0
    // Predicated region
    $region2: #{tpu_custom_call.1} parent=1 // pred_check
      _
    $region3: #{tpu_custom_call.1} parent=1 // pred_check_branch
      %17 = sbr.rel (0) target = $region5
    $region4: #{tpu_custom_call.1} parent=1 // pred_region
      %s19 = ssub.s32 128, 128
      %20 = vsyncadd [#allocation3], %s19
      %s22 = sshll.u32 [#allocation2], 4
      %s23 = int_to_ptr.vmem [resolvable:$true] %s22
      %25 = dma.hbm_to_vmem [thread:$0]  %s0, 128, %s23, [#allocation3]
    $region5: #{tpu_custom_call.1} parent=1 // pred_fallthru
      _
    // Predicated region
    $region6: #{tpu_custom_call.1} parent=1 // pred_check
      _
    $region7: #{tpu_custom_call.1} parent=1 // pred_check_branch
      %27 = sbr.rel (0) target = $region9
    $region8: #{tpu_custom_call.1} parent=1 // pred_region
      %s29 = ssub.s32 512, 512
      %30 = vsyncadd [#allocation6], %s29
      %s31 = sshll.u32 [#allocation5], 4
      %s32 = int_to_ptr.vmem [resolvable:$true] %s31
      %37 = dma.hbm_to_vmem [thread:$0]  %s1, 512, %s32, [#allocation6], 128, 128, 8
    $region9: #{tpu_custom_call.1} parent=1 // pred_fallthru
      _
    // Predicated region
    $region10: #{tpu_custom_call.1} parent=1 // pred_check
      _
    $region11: #{tpu_custom_call.1} parent=1 // pred_check_branch
      %39 = sbr.rel (0) target = $region13
    $region12: #{tpu_custom_call.1} parent=1 // pred_region
      _
    $region13: #{tpu_custom_call.1} parent=1 // pred_fallthru
      _
    // Predicated region
    $region14: #{tpu_custom_call.1} parent=1 // pred_check
      _
    $region15: #{tpu_custom_call.1} parent=1 // pred_check_branch
      %41 = sbr.rel (0) target = $region17
    $region16: #{tpu_custom_call.1} parent=1 // pred_region
      %s43 = ssub.s32 2048, 2048
      %44 = vsyncadd [#allocation6], %s43
      %s45 = sshll.u32 [#allocation7], 4
      %s46 = int_to_ptr.vmem [resolvable:$true] %s45
      %51 = dma.hbm_to_vmem [thread:$0]  %s3, 2048, %s46, [#allocation6], 128, 128, 8
    $region17: #{tpu_custom_call.1} parent=1 // pred_fallthru
      _
    // Predicated region
    $region18: #{tpu_custom_call.1} parent=1 // pred_check
      _
    $region19: #{tpu_custom_call.1} parent=1 // pred_check_branch
      %53 = sbr.rel (0) target = $region21
    $region20: #{tpu_custom_call.1} parent=1 // pred_region
      _
    $region21: #{tpu_custom_call.1} parent=1 // pred_fallthru
      _
    // Predicated region
    $region22: #{tpu_custom_call.1} parent=1 // pred_check
      _
    $region23: #{tpu_custom_call.1} parent=1 // pred_check_branch
      %55 = sbr.rel (0) target = $region25
    $region24: #{tpu_custom_call.1} parent=1 // pred_region
      %s57 = ssub.s32 2048, 2048
      %58 = vsyncadd [#allocation9], %s57
      %s59 = sshll.u32 [#allocation8], 4
      %s60 = int_to_ptr.vmem [resolvable:$true] %s59
      %65 = dma.hbm_to_vmem [thread:$0]  %s5, 2048, %s60, [#allocation9], 128, 128, 8
    $region25: #{tpu_custom_call.1} parent=1 // pred_fallthru
      _
    // Predicated region
    $region26: #{tpu_custom_call.1} parent=1 // pred_check
      _
    $region27: #{tpu_custom_call.1} parent=1 // pred_check_branch
      %67 = sbr.rel (0) target = $region29
    $region28: #{tpu_custom_call.1} parent=1 // pred_region
      _
    $region29: #{tpu_custom_call.1} parent=1 // pred_fallthru
      _
    // Predicated region
    $region30: #{tpu_custom_call.1} parent=1 // pred_check
      _
    $region31: #{tpu_custom_call.1} parent=1 // pred_check_branch
      %69 = sbr.rel (0) target = $region33
    $region32: #{tpu_custom_call.1} parent=1 // pred_region
      %70 = dma.done [#allocation3], 128
    $region33: #{tpu_custom_call.1} parent=1 // pred_fallthru
      _
    // Predicated region
    $region34: #{tpu_custom_call.1} parent=1 // pred_check
      _
    $region35: #{tpu_custom_call.1} parent=1 // pred_check_branch
      %72 = sbr.rel (0) target = $region37
    $region36: #{tpu_custom_call.1} parent=1 // pred_region
      %73 = dma.done [#allocation6], 512
    $region37: #{tpu_custom_call.1} parent=1 // pred_fallthru
      _
    // Predicated region
    $region38: #{tpu_custom_call.1} parent=1 // pred_check
      _
    $region39: #{tpu_custom_call.1} parent=1 // pred_check_branch
      %75 = sbr.rel (0) target = $region41
    $region40: #{tpu_custom_call.1} parent=1 // pred_region
      %76 = dma.done [#allocation6], 2048
    $region41: #{tpu_custom_call.1} parent=1 // pred_fallthru
      _
    // Predicated region
    $region42: #{tpu_custom_call.1} parent=1 // pred_check
      _
    $region43: #{tpu_custom_call.1} parent=1 // pred_check_branch
      %78 = sbr.rel (0) target = $region45
    $region44: #{tpu_custom_call.1} parent=1 // pred_region
      %79 = dma.done [#allocation9], 2048
    $region45: #{tpu_custom_call.1} parent=1 // pred_fallthru
      _
    %v80 = vld [vmem:[#allocation2] sm:$0xff]
    %v81 = vld [vmem:[#allocation5] sm:$0xff]
    %v82 = vld [vmem:[#allocation5 + $0x8] sm:$0xff]
    %v83 = vld [vmem:[#allocation5 + $0x10] sm:$0xff]
    %v84 = vld [vmem:[#allocation5 + $0x18] sm:$0xff]
    %v85 = vld [vmem:[%s2] sm:$0x1]
    %v87 = vlaneseq
    %v88 = vshrl.u32 %v87, 7
    %v89 = vsub.s32 0, %v88
    %v90 = vrot.slane %v85, %v89
    %vm92 = vcmask 261120
    %v94 = vsel %vm92, %v80, 0
    %96 = vmatprep.subr.mxu0 0.0
    %97 = vmatpush1.msra.mxu0 0.0
    %98 = vmatprep.subr.mxu0 0.0
    %99 = vmatpush1.msra.mxu0 0.0
    %100 = vmatprep.subr.mxu0 0.0
    %101 = vmatpush1.msra.mxu0 0.0
    %102 = vmatprep.subr.mxu0 0.0
    %103 = vmatpush1.msra.mxu0 0.0
    %104 = vmatprep.subr.mxu0 0.0
    %105 = vmatpush1.msra.mxu0 0.0
    %106 = vmatprep.subr.mxu0 0.0
    %107 = vmatpush1.msra.mxu0 0.0
    %108 = vmatprep.subr.mxu0 0.0
    %109 = vmatpush1.msra.mxu0 0.0
    %110 = vmatprep.subr.mxu0 0.0
    %111 = vmatpush1.msra.mxu0 0.0
    %112 = vmatprep.subr.mxu0 0.0
    %113 = vmatpush1.msra.mxu0 0.0
    %114 = vmatprep.subr.mxu0 0.0
    %115 = vmatpush1.msra.mxu0 0.0
    %116 = vmatprep.subr.mxu0 0.0
    %117 = vmatpush1.msra.mxu0 0.0
    %118 = vmatprep.subr.mxu0 0.0
    %119 = vmatpush1.msra.mxu0 0.0
    %120 = vmatprep.subr.mxu0 0.0
    %121 = vmatpush1.msra.mxu0 %v84
    %122 = vmatprep.subr.mxu0 0.0
    %123 = vmatpush1.msra.mxu0 %v83
    %124 = vmatprep.subr.mxu0 0.0
    %125 = vmatpush1.msra.mxu0 %v82
    %126 = vmatprep.subr.mxu0 0.0
    %127 = vmatpush1.msra.mxu0 %v81
    %128 = vmatprep.subr.mxu0 0.0
    %129 = vmatpush2.msra.mxu0 0.0
    %130 = vmatprep.subr.mxu0 0.0
    %131 = vmatpush2.msra.mxu0 0.0
    %132 = vmatprep.subr.mxu0 0.0
    %133 = vmatpush2.msra.mxu0 0.0
    %134 = vmatprep.subr.mxu0 0.0
    %135 = vmatpush2.msra.mxu0 0.0
    %136 = vmatprep.subr.mxu0 0.0
    %137 = vmatpush2.msra.mxu0 0.0
    %138 = vmatprep.subr.mxu0 0.0
    %139 = vmatpush2.msra.mxu0 0.0
    %140 = vmatprep.subr.mxu0 0.0
    %141 = vmatpush2.msra.mxu0 0.0
    %142 = vmatprep.subr.mxu0 0.0
    %143 = vmatpush2.msra.mxu0 0.0
    %144 = vmatprep.subr.mxu0 0.0
    %145 = vmatpush2.msra.mxu0 0.0
    %146 = vmatprep.subr.mxu0 0.0
    %147 = vmatpush2.msra.mxu0 0.0
    %148 = vmatprep.subr.mxu0 0.0
    %149 = vmatpush2.msra.mxu0 0.0
    %150 = vmatprep.subr.mxu0 0.0
    %151 = vmatpush2.msra.mxu0 0.0
    %152 = vmatprep.subr.mxu0 0.0
    %153 = vmatpush2.msra.mxu0 0.0
    %154 = vmatprep.subr.mxu0 0.0
    %155 = vmatpush2.msra.mxu0 0.0
    %156 = vmatprep.subr.mxu0 0.0
    %157 = vmatpush2.msra.mxu0 0.0
    %158 = vmatprep.subr.mxu0 0.0
    %159 = vmatpush2.msra.mxu0 0.0
    %160 = vmatprep.mubr.f32.mxu0 0.0
    %161 = vmatmul.mubr.f32.gmra.mxu0 %v94
    %v162 = vpop.f32.mrf.mxu0
    %v163 = vadd.f32 %v90, %v162
    %v164 = vpop.f32.mrf.mxu0
    %165 = vdwg.mxu0
    %v166 = vmax.f32 %v163, 0.0
    %v167 = vld [vmem:[#allocation7] sm:$0xff]
    %v168 = vld [vmem:[#allocation7 + $0x8] sm:$0xff]
    %v169 = vld [vmem:[#allocation7 + $0x10] sm:$0xff]
    %v170 = vld [vmem:[#allocation7 + $0x18] sm:$0xff]
    %v171 = vld [vmem:[#allocation7 + $0x20] sm:$0xff]
    %v172 = vld [vmem:[#allocation7 + $0x28] sm:$0xff]
    %v173 = vld [vmem:[#allocation7 + $0x30] sm:$0xff]
    %v174 = vld [vmem:[#allocation7 + $0x38] sm:$0xff]
    %v175 = vld [vmem:[#allocation7 + $0x40] sm:$0xff]
    %v176 = vld [vmem:[#allocation7 + $0x48] sm:$0xff]
    %v177 = vld [vmem:[#allocation7 + $0x50] sm:$0xff]
    %v178 = vld [vmem:[#allocation7 + $0x58] sm:$0xff]
    %v179 = vld [vmem:[#allocation7 + $0x60] sm:$0xff]
    %v180 = vld [vmem:[#allocation7 + $0x68] sm:$0xff]
    %v181 = vld [vmem:[#allocation7 + $0x70] sm:$0xff]
    %v182 = vld [vmem:[#allocation7 + $0x78] sm:$0xff]
    %v183 = vld [vmem:[%s4] sm:$0x1]
    %v185 = vlaneseq
    %v186 = vshrl.u32 %v185, 7
    %v187 = vsub.s32 0, %v186
    %v188 = vrot.slane %v183, %v187
    %190 = vmatprep.subr.mxu0 0.0
    %191 = vmatpush1.msra.mxu0 %v182
    %192 = vmatprep.subr.mxu0 0.0
    %193 = vmatpush1.msra.mxu0 %v181
    %194 = vmatprep.subr.mxu0 0.0
    %195 = vmatpush1.msra.mxu0 %v180
    %196 = vmatprep.subr.mxu0 0.0
    %197 = vmatpush1.msra.mxu0 %v179
    %198 = vmatprep.subr.mxu0 0.0
    %199 = vmatpush1.msra.mxu0 %v178
    %200 = vmatprep.subr.mxu0 0.0
    %201 = vmatpush1.msra.mxu0 %v177
    %202 = vmatprep.subr.mxu0 0.0
    %203 = vmatpush1.msra.mxu0 %v176
    %204 = vmatprep.subr.mxu0 0.0
    %205 = vmatpush1.msra.mxu0 %v175
    %206 = vmatprep.subr.mxu0 0.0
    %207 = vmatpush1.msra.mxu0 %v174
    %208 = vmatprep.subr.mxu0 0.0
    %209 = vmatpush1.msra.mxu0 %v173
    %210 = vmatprep.subr.mxu0 0.0
    %211 = vmatpush1.msra.mxu0 %v172
    %212 = vmatprep.subr.mxu0 0.0
    %213 = vmatpush1.msra.mxu0 %v171
    %214 = vmatprep.subr.mxu0 0.0
    %215 = vmatpush1.msra.mxu0 %v170
    %216 = vmatprep.subr.mxu0 0.0
    %217 = vmatpush1.msra.mxu0 %v169
    %218 = vmatprep.subr.mxu0 0.0
    %219 = vmatpush1.msra.mxu0 %v168
    %220 = vmatprep.subr.mxu0 0.0
    %221 = vmatpush1.msra.mxu0 %v167
    %222 = vmatprep.subr.mxu0 0.0
    %223 = vmatpush2.msra.mxu0 0.0
    %224 = vmatprep.subr.mxu0 0.0
    %225 = vmatpush2.msra.mxu0 0.0
    %226 = vmatprep.subr.mxu0 0.0
    %227 = vmatpush2.msra.mxu0 0.0
    %228 = vmatprep.subr.mxu0 0.0
    %229 = vmatpush2.msra.mxu0 0.0
    %230 = vmatprep.subr.mxu0 0.0
    %231 = vmatpush2.msra.mxu0 0.0
    %232 = vmatprep.subr.mxu0 0.0
    %233 = vmatpush2.msra.mxu0 0.0
    %234 = vmatprep.subr.mxu0 0.0
    %235 = vmatpush2.msra.mxu0 0.0
    %236 = vmatprep.subr.mxu0 0.0
    %237 = vmatpush2.msra.mxu0 0.0
    %238 = vmatprep.subr.mxu0 0.0
    %239 = vmatpush2.msra.mxu0 0.0
    %240 = vmatprep.subr.mxu0 0.0
    %241 = vmatpush2.msra.mxu0 0.0
    %242 = vmatprep.subr.mxu0 0.0
    %243 = vmatpush2.msra.mxu0 0.0
    %244 = vmatprep.subr.mxu0 0.0
    %245 = vmatpush2.msra.mxu0 0.0
    %246 = vmatprep.subr.mxu0 0.0
    %247 = vmatpush2.msra.mxu0 0.0
    %248 = vmatprep.subr.mxu0 0.0
    %249 = vmatpush2.msra.mxu0 0.0
    %250 = vmatprep.subr.mxu0 0.0
    %251 = vmatpush2.msra.mxu0 0.0
    %252 = vmatprep.subr.mxu0 0.0
    %253 = vmatpush2.msra.mxu0 0.0
    %254 = vmatprep.mubr.f32.mxu0 0.0
    %255 = vmatmul.mubr.f32.gmra.mxu0 %v166
    %v256 = vpop.f32.mrf.mxu0
    %v257 = vadd.f32 %v188, %v256
    %v258 = vpop.f32.mrf.mxu0
    %259 = vdwg.mxu0
    %v260 = vmax.f32 %v257, 0.0
    %v261 = vld [vmem:[#allocation8] sm:$0xff]
    %v262 = vld [vmem:[#allocation8 + $0x8] sm:$0xff]
    %v263 = vld [vmem:[#allocation8 + $0x10] sm:$0xff]
    %v264 = vld [vmem:[#allocation8 + $0x18] sm:$0xff]
    %v265 = vld [vmem:[#allocation8 + $0x20] sm:$0xff]
    %v266 = vld [vmem:[#allocation8 + $0x28] sm:$0xff]
    %v267 = vld [vmem:[#allocation8 + $0x30] sm:$0xff]
    %v268 = vld [vmem:[#allocation8 + $0x38] sm:$0xff]
    %v269 = vld [vmem:[#allocation8 + $0x40] sm:$0xff]
    %v270 = vld [vmem:[#allocation8 + $0x48] sm:$0xff]
    %v271 = vld [vmem:[#allocation8 + $0x50] sm:$0xff]
    %v272 = vld [vmem:[#allocation8 + $0x58] sm:$0xff]
    %v273 = vld [vmem:[#allocation8 + $0x60] sm:$0xff]
    %v274 = vld [vmem:[#allocation8 + $0x68] sm:$0xff]
    %v275 = vld [vmem:[#allocation8 + $0x70] sm:$0xff]
    %v276 = vld [vmem:[#allocation8 + $0x78] sm:$0xff]
    %v277 = vld [vmem:[%s6] sm:$0x1]
    %v279 = vlaneseq
    %v280 = vshrl.u32 %v279, 7
    %v281 = vsub.s32 0, %v280
    %v282 = vrot.slane %v277, %v281
    %284 = vmatprep.subr.mxu0 0.0
    %285 = vmatpush1.msra.mxu0 %v276
    %286 = vmatprep.subr.mxu0 0.0
    %287 = vmatpush1.msra.mxu0 %v275
    %288 = vmatprep.subr.mxu0 0.0
    %289 = vmatpush1.msra.mxu0 %v274
    %290 = vmatprep.subr.mxu0 0.0
    %291 = vmatpush1.msra.mxu0 %v273
    %292 = vmatprep.subr.mxu0 0.0
    %293 = vmatpush1.msra.mxu0 %v272
    %294 = vmatprep.subr.mxu0 0.0
    %295 = vmatpush1.msra.mxu0 %v271
    %296 = vmatprep.subr.mxu0 0.0
    %297 = vmatpush1.msra.mxu0 %v270
    %298 = vmatprep.subr.mxu0 0.0
    %299 = vmatpush1.msra.mxu0 %v269
    %300 = vmatprep.subr.mxu0 0.0
    %301 = vmatpush1.msra.mxu0 %v268
    %302 = vmatprep.subr.mxu0 0.0
    %303 = vmatpush1.msra.mxu0 %v267
    %304 = vmatprep.subr.mxu0 0.0
    %305 = vmatpush1.msra.mxu0 %v266
    %306 = vmatprep.subr.mxu0 0.0
    %307 = vmatpush1.msra.mxu0 %v265
    %308 = vmatprep.subr.mxu0 0.0
    %309 = vmatpush1.msra.mxu0 %v264
    %310 = vmatprep.subr.mxu0 0.0
    %311 = vmatpush1.msra.mxu0 %v263
    %312 = vmatprep.subr.mxu0 0.0
    %313 = vmatpush1.msra.mxu0 %v262
    %314 = vmatprep.subr.mxu0 0.0
    %315 = vmatpush1.msra.mxu0 %v261
    %316 = vmatprep.subr.mxu0 0.0
    %317 = vmatpush2.msra.mxu0 0.0
    %318 = vmatprep.subr.mxu0 0.0
    %319 = vmatpush2.msra.mxu0 0.0
    %320 = vmatprep.subr.mxu0 0.0
    %321 = vmatpush2.msra.mxu0 0.0
    %322 = vmatprep.subr.mxu0 0.0
    %323 = vmatpush2.msra.mxu0 0.0
    %324 = vmatprep.subr.mxu0 0.0
    %325 = vmatpush2.msra.mxu0 0.0
    %326 = vmatprep.subr.mxu0 0.0
    %327 = vmatpush2.msra.mxu0 0.0
    %328 = vmatprep.subr.mxu0 0.0
    %329 = vmatpush2.msra.mxu0 0.0
    %330 = vmatprep.subr.mxu0 0.0
    %331 = vmatpush2.msra.mxu0 0.0
    %332 = vmatprep.subr.mxu0 0.0
    %333 = vmatpush2.msra.mxu0 0.0
    %334 = vmatprep.subr.mxu0 0.0
    %335 = vmatpush2.msra.mxu0 0.0
    %336 = vmatprep.subr.mxu0 0.0
    %337 = vmatpush2.msra.mxu0 0.0
    %338 = vmatprep.subr.mxu0 0.0
    %339 = vmatpush2.msra.mxu0 0.0
    %340 = vmatprep.subr.mxu0 0.0
    %341 = vmatpush2.msra.mxu0 0.0
    %342 = vmatprep.subr.mxu0 0.0
    %343 = vmatpush2.msra.mxu0 0.0
    %344 = vmatprep.subr.mxu0 0.0
    %345 = vmatpush2.msra.mxu0 0.0
    %346 = vmatprep.subr.mxu0 0.0
    %347 = vmatpush2.msra.mxu0 0.0
    %348 = vmatprep.mubr.f32.mxu0 0.0
    %349 = vmatmul.mubr.f32.gmra.mxu0 %v260
    %v350 = vpop.f32.mrf.mxu0
    %v351 = vadd.f32 %v282, %v350
    %v352 = vpop.f32.mrf.mxu0
    %353 = vdwg.mxu0
    %354 = vst [vmem:[#allocation10] sm:$0xff] %v351
    // Predicated region
    $region46: #{tpu_custom_call.1} parent=1 // pred_check
      _
    $region47: #{tpu_custom_call.1} parent=1 // pred_check_branch
      %356 = sbr.rel (0) target = $region49
    $region48: #{tpu_custom_call.1} parent=1 // pred_region
      %s358 = ssub.s32 128, 128
      %359 = vsyncadd [#allocation4], %s358
      %s361 = sshll.u32 [#allocation10], 4
      %s362 = int_to_ptr.vmem [resolvable:$true] %s361
      %364 = dma.vmem_to_hbm [thread:$0]  %s362, 128, %s7, [#allocation4]
    $region49: #{tpu_custom_call.1} parent=1 // pred_fallthru
      _
    // Predicated region
    $region50: #{tpu_custom_call.1} parent=1 // pred_check
      _
    $region51: #{tpu_custom_call.1} parent=1 // pred_check_branch
      %366 = sbr.rel (0) target = $region53
    $region52: #{tpu_custom_call.1} parent=1 // pred_region
      %367 = dma.done [#allocation4], 128
    $region53: #{tpu_custom_call.1} parent=1 // pred_fallthru
      _
    %368 = vsyncpa [#allocation3], 1
    %369 = vsyncpa [#allocation6], 1
    %370 = vsyncpa [#allocation9], 1
    %371 = vsyncpa [#allocation4], 1

</llo_original>
